<compile_context>
chip_gen: v6e
topology: v6e:2x2x1
jax: 0.10.0
libtpu: 0.0.40
codegen_flags: <defaults>
</compile_context>

<pallas_src>
import functools

import jax
import jax.numpy as jnp
import numpy as np
from jax import lax
from jax.experimental import pallas as pl
from jax.experimental.pallas import tpu as pltpu

_MARGIN = 128  # lane-aligned zero margin around the flattened spatial axis


def _resblock_kernel(xm_ref, w1_ref, w2_ref, mask_ref, out_ref, im_ref, h1m_ref,
                     *, Wp, KPAD):
    """One batch element per grid step.

    xm_ref  : (1, C, S + 2*_MARGIN) f32  zero-padded input, spatial axis (H+2)*(W+2)
                                         flattened, with a zero margin on each side.
    w1_ref  : (C, 9*KPAD) bf16           conv1 weights, tap-major, per-tap K padded.
    w2_ref  : (C, 9*KPAD) bf16           conv2 weights.
    mask_ref: (1, S) f32                 1.0 on interior pixels, 0.0 on the padding ring.
    out_ref : (1, C, S) f32              output on the padded working grid (ring is junk,
                                         sliced off in the wrapper).
    im_ref  : VMEM (9*KPAD, S) f32       im2col staging slab (shared by both convs).
    h1m_ref : VMEM (C, S + 2*_MARGIN)    margin-padded staging for the masked h1.
    """
    C = out_ref.shape[1]
    S = out_ref.shape[2]
    M = _MARGIN
    taps = [(kh - 1) * Wp + (kw - 1) for kh in range(3) for kw in range(3)]

    # Scratch persists across grid steps: margins and padded-K rows only need zeroing once.
    @pl.when(pl.program_id(0) == 0)
    def _init_scratch():
        im_ref[...] = jnp.zeros_like(im_ref)
        h1m_ref[...] = jnp.zeros_like(h1m_ref)

    # ---- conv1: stage 9 shifted views, then one fused (C,9*KPAD)x(9*KPAD,S) matmul ----
    for t, d in enumerate(taps):
        im_ref[t * KPAD:t * KPAD + C, :] = xm_ref[0, :, M + d:M + d + S]
    acc1 = jnp.dot(w1_ref[...], im_ref[...].astype(jnp.bfloat16),
                   preferred_element_type=jnp.float32)            # (C, S) f32
    # ReLU fused with zeroing of the conv padding ring (replaces padded-scratch zeroing).
    h1 = jnp.maximum(acc1, 0.0) * mask_ref[...]

    # Stage masked h1 behind a lane-aligned margin so conv2 taps are contiguous slices.
    h1m_ref[:, M:M + S] = h1

    # ---- conv2 ----
    for t, d in enumerate(taps):
        im_ref[t * KPAD:t * KPAD + C, :] = h1m_ref[:, M + d:M + d + S]
    acc2 = jnp.dot(w2_ref[...], im_ref[...].astype(jnp.bfloat16),
                   preferred_element_type=jnp.float32)            # (C, S) f32

    # ---- residual add (exact f32) + final ReLU ----
    residual = xm_ref[0, :, M:M + S]
    out_ref[0] = jnp.maximum(acc2 + residual, 0.0).astype(out_ref.dtype)


def _pack_weights(w_oihw, kpad):
    """(O, I, 3, 3) -> (O, 9*kpad) bf16, column index = tap*kpad + in_channel."""
    o, i = w_oihw.shape[0], w_oihw.shape[1]
    w = jnp.transpose(w_oihw, (0, 2, 3, 1)).reshape(o, 9, i)      # (O, kh*kw, I)
    w = jnp.pad(w, ((0, 0), (0, 0), (0, kpad - i)))
    return w.reshape(o, 9 * kpad).astype(jnp.bfloat16)


@jax.jit
def residual_block_pallas(x_nchw, w1_oihw, w2_oihw):
    """x_nchw: (N, C, H, W); weights in PyTorch OIHW layout, no bias."""
    N, C, H, W = x_nchw.shape
    Cout = w1_oihw.shape[0]
    assert Cout == C, "stride=1 & downsample=None requires in_channels == out_channels"
    Hp, Wp = H + 2, W + 2
    S = Hp * Wp
    Smm = S + 2 * _MARGIN
    KPAD = max(8, ((C + 7) // 8) * 8)        # per-tap K rows, 8-sublane aligned

    x = x_nchw.astype(jnp.float32)
    # Conv padding=1, flatten spatial, add lane margins (all zeros).
    xf = jnp.pad(x, ((0, 0), (0, 0), (1, 1), (1, 1))).reshape(N, C, S)
    xm = jnp.pad(xf, ((0, 0), (0, 0), (_MARGIN, _MARGIN)))

    w1m = _pack_weights(w1_oihw, KPAD)       # (C, 9*KPAD) bf16
    w2m = _pack_weights(w2_oihw, KPAD)

    # Interior mask over the working grid (1 inside the HxW image, 0 on the pad ring).
    mask = jnp.zeros((Hp, Wp), jnp.float32).at[1:H + 1, 1:W + 1].set(1.0).reshape(1, S)

    out_flat = pl.pallas_call(
        functools.partial(_resblock_kernel, Wp=Wp, KPAD=KPAD),
        out_shape=jax.ShapeDtypeStruct((N, C, S), jnp.float32),
        grid_spec=pltpu.PrefetchScalarGridSpec(
            num_scalar_prefetch=0,
            grid=(N,),   # batch axis; even N keeps both v7x TensorCores busy
            in_specs=[
                pl.BlockSpec((1, C, Smm), lambda b: (b, 0, 0)),
                pl.BlockSpec((C, 9 * KPAD), lambda b: (0, 0)),
                pl.BlockSpec((C, 9 * KPAD), lambda b: (0, 0)),
                pl.BlockSpec((1, S), lambda b: (0, 0)),
            ],
            out_specs=pl.BlockSpec((1, C, S), lambda b: (b, 0, 0)),
            scratch_shapes=[
                pltpu.VMEM((9 * KPAD, S), jnp.float32),
                pltpu.VMEM((C, Smm), jnp.float32),
            ],
        ),
        compiler_params=pltpu.CompilerParams(
            dimension_semantics=("parallel",)),
    )(xm, w1m, w2m, mask)

    # Drop the padding ring; result is already NCHW.
    return out_flat.reshape(N, C, Hp, Wp)[:, :, 1:H + 1, 1:W + 1]


def _reference(x_nchw, w1_oihw, w2_oihw):
    dn = ("NCHW", "OIHW", "NCHW")
    c1 = lax.conv_general_dilated(x_nchw, w1_oihw, (1, 1), [(1, 1), (1, 1)],
                                  dimension_numbers=dn)
    h = jnp.maximum(c1, 0.0)
    c2 = lax.conv_general_dilated(h, w2_oihw, (1, 1), [(1, 1), (1, 1)],
                                  dimension_numbers=dn)
    return jnp.maximum(c2 + x_nchw, 0.0)


if __name__ == "__main__":
    # Small shapes consistent with the module (stride=1, downsample=None => Cin == Cout).
    N, C, H, W = 2, 4, 16, 16
    key = jax.random.PRNGKey(0)
    kx, k1, k2 = jax.random.split(key, 3)

    x = jax.random.normal(kx, (N, C, H, W), dtype=jnp.float32)

    # Deterministic init mimicking nn.Conv2d default (kaiming-uniform bound = 1/sqrt(fan_in)).
    fan_in = C * 3 * 3
    bound = 1.0 / np.sqrt(fan_in)
    w1 = jax.random.uniform(k1, (C, C, 3, 3), jnp.float32, -bound, bound)
    w2 = jax.random.uniform(k2, (C, C, 3, 3), jnp.float32, -bound, bound)

    out = jax.block_until_ready(residual_block_pallas(x, w1, w2))
    ref = _reference(x, w1, w2)

    assert out.shape == (N, C, H, W)
    # bf16 matmul operands (f32 accumulation, exact f32 residual) => widened tolerance.
    assert np.allclose(np.asarray(out), np.asarray(ref), atol=3e-2, rtol=3e-2)

    print("KERNEL_OK")
</pallas_src>

<mosaic_0001>
module attributes {stable_mosaic.version = 11 : i64} {
  func.func @_resblock_kernel(%arg0: i32, %arg1: memref<1x4x580xf32, #tpu.memory_space<vmem>>, %arg2: memref<4x72xbf16, #tpu.memory_space<vmem>>, %arg3: memref<4x72xbf16, #tpu.memory_space<vmem>>, %arg4: memref<1x324xf32, #tpu.memory_space<vmem>>, %arg5: memref<1x4x324xf32, #tpu.memory_space<vmem>>, %arg6: memref<72x324xf32, #tpu.memory_space<vmem>>, %arg7: memref<4x580xf32, #tpu.memory_space<vmem>>) attributes {dimension_semantics = [#tpu.dimension_semantics<parallel>], iteration_bounds = array<i64: 2>, scalar_prefetch = 0 : i64, scratch_operands = 2 : i64, tpu.core_type = #tpu.core_type<tc>, window_params = [{transform_indices = @transform_0, window_bounds = array<i64: 1, 4, 580>}, {pipeline_mode = #tpu.pipeline_mode<synchronous>, transform_indices = @transform_1, window_bounds = array<i64: 4, 72>}, {pipeline_mode = #tpu.pipeline_mode<synchronous>, transform_indices = @transform_2, window_bounds = array<i64: 4, 72>}, {pipeline_mode = #tpu.pipeline_mode<synchronous>, transform_indices = @transform_3, window_bounds = array<i64: 1, 324>}, {transform_indices = @transform_4, window_bounds = array<i64: 1, 4, 324>}]} {
    %c0_i32 = arith.constant 0 : i32
    %0 = arith.cmpi eq, %arg0, %c0_i32 : i32
    %1 = arith.extui %0 : i1 to i32
    %c0_i32_0 = arith.constant 0 : i32
    %2 = arith.cmpi ne, %1, %c0_i32_0 : i32
    scf.if %2 {
      %cst_85 = arith.constant 0.000000e+00 : f32
      %70 = vector.broadcast %cst_85 : f32 to vector<72x324xf32>
      %c0_86 = arith.constant 0 : index
      %c0_87 = arith.constant 0 : index
      %71 = vector.load %arg6[%c0_86, %c0_87] : memref<72x324xf32, #tpu.memory_space<vmem>>, vector<72x324xf32>
      tpu.vector_store %arg6[%c0_86, %c0_87], %70 {strides = array<i32>} : memref<72x324xf32, #tpu.memory_space<vmem>>, vector<72x324xf32>,
      %cst_88 = arith.constant 0.000000e+00 : f32
      %72 = vector.broadcast %cst_88 : f32 to vector<4x580xf32>
      %c0_89 = arith.constant 0 : index
      %c0_90 = arith.constant 0 : index
      %73 = vector.load %arg7[%c0_89, %c0_90] : memref<4x580xf32, #tpu.memory_space<vmem>>, vector<4x580xf32>
      tpu.vector_store %arg7[%c0_89, %c0_90], %72 {strides = array<i32>} : memref<4x580xf32, #tpu.memory_space<vmem>>, vector<4x580xf32>,
    } else {
    }
    %c0 = arith.constant 0 : index
    %c0_1 = arith.constant 0 : index
    %c109 = arith.constant 109 : index
    %3 = vector.load %arg1[%c0, %c0_1, %c109] : memref<1x4x580xf32, #tpu.memory_space<vmem>>, vector<1x4x324xf32>
    %4 = vector.shape_cast %3 : vector<1x4x324xf32> to vector<4x324xf32>
    %c0_2 = arith.constant 0 : index
    %c0_3 = arith.constant 0 : index
    %5 = vector.load %arg6[%c0_2, %c0_3] : memref<72x324xf32, #tpu.memory_space<vmem>>, vector<4x324xf32>
    tpu.vector_store %arg6[%c0_2, %c0_3], %4 {strides = array<i32>} : memref<72x324xf32, #tpu.memory_space<vmem>>, vector<4x324xf32>,
    %c0_4 = arith.constant 0 : index
    %c0_5 = arith.constant 0 : index
    %c110 = arith.constant 110 : index
    %6 = vector.load %arg1[%c0_4, %c0_5, %c110] : memref<1x4x580xf32, #tpu.memory_space<vmem>>, vector<1x4x324xf32>
    %7 = vector.shape_cast %6 : vector<1x4x324xf32> to vector<4x324xf32>
    %c8 = arith.constant 8 : index
    %c0_6 = arith.constant 0 : index
    %8 = vector.load %arg6[%c8, %c0_6] : memref<72x324xf32, #tpu.memory_space<vmem>>, vector<4x324xf32>
    tpu.vector_store %arg6[%c8, %c0_6], %7 {strides = array<i32>} : memref<72x324xf32, #tpu.memory_space<vmem>>, vector<4x324xf32>,
    %c0_7 = arith.constant 0 : index
    %c0_8 = arith.constant 0 : index
    %c111 = arith.constant 111 : index
    %9 = vector.load %arg1[%c0_7, %c0_8, %c111] : memref<1x4x580xf32, #tpu.memory_space<vmem>>, vector<1x4x324xf32>
    %10 = vector.shape_cast %9 : vector<1x4x324xf32> to vector<4x324xf32>
    %c16 = arith.constant 16 : index
    %c0_9 = arith.constant 0 : index
    %11 = vector.load %arg6[%c16, %c0_9] : memref<72x324xf32, #tpu.memory_space<vmem>>, vector<4x324xf32>
    tpu.vector_store %arg6[%c16, %c0_9], %10 {strides = array<i32>} : memref<72x324xf32, #tpu.memory_space<vmem>>, vector<4x324xf32>,
    %c0_10 = arith.constant 0 : index
    %c0_11 = arith.constant 0 : index
    %c127 = arith.constant 127 : index
    %12 = vector.load %arg1[%c0_10, %c0_11, %c127] : memref<1x4x580xf32, #tpu.memory_space<vmem>>, vector<1x4x324xf32>
    %13 = vector.shape_cast %12 : vector<1x4x324xf32> to vector<4x324xf32>
    %c24 = arith.constant 24 : index
    %c0_12 = arith.constant 0 : index
    %14 = vector.load %arg6[%c24, %c0_12] : memref<72x324xf32, #tpu.memory_space<vmem>>, vector<4x324xf32>
    tpu.vector_store %arg6[%c24, %c0_12], %13 {strides = array<i32>} : memref<72x324xf32, #tpu.memory_space<vmem>>, vector<4x324xf32>,
    %c0_13 = arith.constant 0 : index
    %c0_14 = arith.constant 0 : index
    %c128 = arith.constant 128 : index
    %15 = vector.load %arg1[%c0_13, %c0_14, %c128] : memref<1x4x580xf32, #tpu.memory_space<vmem>>, vector<1x4x324xf32>
    %16 = vector.shape_cast %15 : vector<1x4x324xf32> to vector<4x324xf32>
    %c32 = arith.constant 32 : index
    %c0_15 = arith.constant 0 : index
    %17 = vector.load %arg6[%c32, %c0_15] : memref<72x324xf32, #tpu.memory_space<vmem>>, vector<4x324xf32>
    tpu.vector_store %arg6[%c32, %c0_15], %16 {strides = array<i32>} : memref<72x324xf32, #tpu.memory_space<vmem>>, vector<4x324xf32>,
    %c0_16 = arith.constant 0 : index
    %c0_17 = arith.constant 0 : index
    %c129 = arith.constant 129 : index
    %18 = vector.load %arg1[%c0_16, %c0_17, %c129] : memref<1x4x580xf32, #tpu.memory_space<vmem>>, vector<1x4x324xf32>
    %19 = vector.shape_cast %18 : vector<1x4x324xf32> to vector<4x324xf32>
    %c40 = arith.constant 40 : index
    %c0_18 = arith.constant 0 : index
    %20 = vector.load %arg6[%c40, %c0_18] : memref<72x324xf32, #tpu.memory_space<vmem>>, vector<4x324xf32>
    tpu.vector_store %arg6[%c40, %c0_18], %19 {strides = array<i32>} : memref<72x324xf32, #tpu.memory_space<vmem>>, vector<4x324xf32>,
    %c0_19 = arith.constant 0 : index
    %c0_20 = arith.constant 0 : index
    %c145 = arith.constant 145 : index
    %21 = vector.load %arg1[%c0_19, %c0_20, %c145] : memref<1x4x580xf32, #tpu.memory_space<vmem>>, vector<1x4x324xf32>
    %22 = vector.shape_cast %21 : vector<1x4x324xf32> to vector<4x324xf32>
    %c48 = arith.constant 48 : index
    %c0_21 = arith.constant 0 : index
    %23 = vector.load %arg6[%c48, %c0_21] : memref<72x324xf32, #tpu.memory_space<vmem>>, vector<4x324xf32>
    tpu.vector_store %arg6[%c48, %c0_21], %22 {strides = array<i32>} : memref<72x324xf32, #tpu.memory_space<vmem>>, vector<4x324xf32>,
    %c0_22 = arith.constant 0 : index
    %c0_23 = arith.constant 0 : index
    %c146 = arith.constant 146 : index
    %24 = vector.load %arg1[%c0_22, %c0_23, %c146] : memref<1x4x580xf32, #tpu.memory_space<vmem>>, vector<1x4x324xf32>
    %25 = vector.shape_cast %24 : vector<1x4x324xf32> to vector<4x324xf32>
    %c56 = arith.constant 56 : index
    %c0_24 = arith.constant 0 : index
    %26 = vector.load %arg6[%c56, %c0_24] : memref<72x324xf32, #tpu.memory_space<vmem>>, vector<4x324xf32>
    tpu.vector_store %arg6[%c56, %c0_24], %25 {strides = array<i32>} : memref<72x324xf32, #tpu.memory_space<vmem>>, vector<4x324xf32>,
    %c0_25 = arith.constant 0 : index
    %c0_26 = arith.constant 0 : index
    %c147 = arith.constant 147 : index
    %27 = vector.load %arg1[%c0_25, %c0_26, %c147] : memref<1x4x580xf32, #tpu.memory_space<vmem>>, vector<1x4x324xf32>
    %28 = vector.shape_cast %27 : vector<1x4x324xf32> to vector<4x324xf32>
    %c64 = arith.constant 64 : index
    %c0_27 = arith.constant 0 : index
    %29 = vector.load %arg6[%c64, %c0_27] : memref<72x324xf32, #tpu.memory_space<vmem>>, vector<4x324xf32>
    tpu.vector_store %arg6[%c64, %c0_27], %28 {strides = array<i32>} : memref<72x324xf32, #tpu.memory_space<vmem>>, vector<4x324xf32>,
    %c0_28 = arith.constant 0 : index
    %c0_29 = arith.constant 0 : index
    %30 = vector.load %arg2[%c0_28, %c0_29] : memref<4x72xbf16, #tpu.memory_space<vmem>>, vector<4x72xbf16>
    %c0_30 = arith.constant 0 : index
    %c0_31 = arith.constant 0 : index
    %31 = vector.load %arg6[%c0_30, %c0_31] : memref<72x324xf32, #tpu.memory_space<vmem>>, vector<72x324xf32>
    %32 = arith.truncf %31 : vector<72x324xf32> to vector<72x324xbf16>
    %cst = arith.constant dense<0.000000e+00> : vector<4x324xf32>
    %33 = tpu.matmul %30, %32, %cst {dimension_numbers = #tpu.dot_dimension_numbers<[1], [0], [0], [1], [0, 0, 1, 1], [], []>} : vector<4x72xbf16>, vector<72x324xbf16>, vector<4x324xf32> -> vector<4x324xf32>
    %cst_32 = arith.constant 0.000000e+00 : f32
    %34 = vector.broadcast %cst_32 : f32 to vector<4x324xf32>
    %35 = arith.maximumf %33, %34 : vector<4x324xf32>
    %c0_33 = arith.constant 0 : index
    %c0_34 = arith.constant 0 : index
    %36 = vector.load %arg4[%c0_33, %c0_34] : memref<1x324xf32, #tpu.memory_space<vmem>>, vector<1x324xf32>
    %37 = vector.broadcast %36 : vector<1x324xf32> to vector<4x324xf32>
    %38 = arith.mulf %35, %37 : vector<4x324xf32>
    %c0_35 = arith.constant 0 : index
    %c128_36 = arith.constant 128 : index
    %39 = vector.load %arg7[%c0_35, %c128_36] : memref<4x580xf32, #tpu.memory_space<vmem>>, vector<4x324xf32>
    tpu.vector_store %arg7[%c0_35, %c128_36], %38 {strides = array<i32>} : memref<4x580xf32, #tpu.memory_space<vmem>>, vector<4x324xf32>,
    %c0_37 = arith.constant 0 : index
    %c109_38 = arith.constant 109 : index
    %40 = vector.load %arg7[%c0_37, %c109_38] : memref<4x580xf32, #tpu.memory_space<vmem>>, vector<4x324xf32>
    %c0_39 = arith.constant 0 : index
    %c0_40 = arith.constant 0 : index
    %41 = vector.load %arg6[%c0_39, %c0_40] : memref<72x324xf32, #tpu.memory_space<vmem>>, vector<4x324xf32>
    tpu.vector_store %arg6[%c0_39, %c0_40], %40 {strides = array<i32>} : memref<72x324xf32, #tpu.memory_space<vmem>>, vector<4x324xf32>,
    %c0_41 = arith.constant 0 : index
    %c110_42 = arith.constant 110 : index
    %42 = vector.load %arg7[%c0_41, %c110_42] : memref<4x580xf32, #tpu.memory_space<vmem>>, vector<4x324xf32>
    %c8_43 = arith.constant 8 : index
    %c0_44 = arith.constant 0 : index
    %43 = vector.load %arg6[%c8_43, %c0_44] : memref<72x324xf32, #tpu.memory_space<vmem>>, vector<4x324xf32>
    tpu.vector_store %arg6[%c8_43, %c0_44], %42 {strides = array<i32>} : memref<72x324xf32, #tpu.memory_space<vmem>>, vector<4x324xf32>,
    %c0_45 = arith.constant 0 : index
    %c111_46 = arith.constant 111 : index
    %44 = vector.load %arg7[%c0_45, %c111_46] : memref<4x580xf32, #tpu.memory_space<vmem>>, vector<4x324xf32>
    %c16_47 = arith.constant 16 : index
    %c0_48 = arith.constant 0 : index
    %45 = vector.load %arg6[%c16_47, %c0_48] : memref<72x324xf32, #tpu.memory_space<vmem>>, vector<4x324xf32>
    tpu.vector_store %arg6[%c16_47, %c0_48], %44 {strides = array<i32>} : memref<72x324xf32, #tpu.memory_space<vmem>>, vector<4x324xf32>,
    %c0_49 = arith.constant 0 : index
    %c127_50 = arith.constant 127 : index
    %46 = vector.load %arg7[%c0_49, %c127_50] : memref<4x580xf32, #tpu.memory_space<vmem>>, vector<4x324xf32>
    %c24_51 = arith.constant 24 : index
    %c0_52 = arith.constant 0 : index
    %47 = vector.load %arg6[%c24_51, %c0_52] : memref<72x324xf32, #tpu.memory_space<vmem>>, vector<4x324xf32>
    tpu.vector_store %arg6[%c24_51, %c0_52], %46 {strides = array<i32>} : memref<72x324xf32, #tpu.memory_space<vmem>>, vector<4x324xf32>,
    %c0_53 = arith.constant 0 : index
    %c128_54 = arith.constant 128 : index
    %48 = vector.load %arg7[%c0_53, %c128_54] : memref<4x580xf32, #tpu.memory_space<vmem>>, vector<4x324xf32>
    %c32_55 = arith.constant 32 : index
    %c0_56 = arith.constant 0 : index
    %49 = vector.load %arg6[%c32_55, %c0_56] : memref<72x324xf32, #tpu.memory_space<vmem>>, vector<4x324xf32>
    tpu.vector_store %arg6[%c32_55, %c0_56], %48 {strides = array<i32>} : memref<72x324xf32, #tpu.memory_space<vmem>>, vector<4x324xf32>,
    %c0_57 = arith.constant 0 : index
    %c129_58 = arith.constant 129 : index
    %50 = vector.load %arg7[%c0_57, %c129_58] : memref<4x580xf32, #tpu.memory_space<vmem>>, vector<4x324xf32>
    %c40_59 = arith.constant 40 : index
    %c0_60 = arith.constant 0 : index
    %51 = vector.load %arg6[%c40_59, %c0_60] : memref<72x324xf32, #tpu.memory_space<vmem>>, vector<4x324xf32>
    tpu.vector_store %arg6[%c40_59, %c0_60], %50 {strides = array<i32>} : memref<72x324xf32, #tpu.memory_space<vmem>>, vector<4x324xf32>,
    %c0_61 = arith.constant 0 : index
    %c145_62 = arith.constant 145 : index
    %52 = vector.load %arg7[%c0_61, %c145_62] : memref<4x580xf32, #tpu.memory_space<vmem>>, vector<4x324xf32>
    %c48_63 = arith.constant 48 : index
    %c0_64 = arith.constant 0 : index
    %53 = vector.load %arg6[%c48_63, %c0_64] : memref<72x324xf32, #tpu.memory_space<vmem>>, vector<4x324xf32>
    tpu.vector_store %arg6[%c48_63, %c0_64], %52 {strides = array<i32>} : memref<72x324xf32, #tpu.memory_space<vmem>>, vector<4x324xf32>,
    %c0_65 = arith.constant 0 : index
    %c146_66 = arith.constant 146 : index
    %54 = vector.load %arg7[%c0_65, %c146_66] : memref<4x580xf32, #tpu.memory_space<vmem>>, vector<4x324xf32>
    %c56_67 = arith.constant 56 : index
    %c0_68 = arith.constant 0 : index
    %55 = vector.load %arg6[%c56_67, %c0_68] : memref<72x324xf32, #tpu.memory_space<vmem>>, vector<4x324xf32>
    tpu.vector_store %arg6[%c56_67, %c0_68], %54 {strides = array<i32>} : memref<72x324xf32, #tpu.memory_space<vmem>>, vector<4x324xf32>,
    %c0_69 = arith.constant 0 : index
    %c147_70 = arith.constant 147 : index
    %56 = vector.load %arg7[%c0_69, %c147_70] : memref<4x580xf32, #tpu.memory_space<vmem>>, vector<4x324xf32>
    %c64_71 = arith.constant 64 : index
    %c0_72 = arith.constant 0 : index
    %57 = vector.load %arg6[%c64_71, %c0_72] : memref<72x324xf32, #tpu.memory_space<vmem>>, vector<4x324xf32>
    tpu.vector_store %arg6[%c64_71, %c0_72], %56 {strides = array<i32>} : memref<72x324xf32, #tpu.memory_space<vmem>>, vector<4x324xf32>,
    %c0_73 = arith.constant 0 : index
    %c0_74 = arith.constant 0 : index
    %58 = vector.load %arg3[%c0_73, %c0_74] : memref<4x72xbf16, #tpu.memory_space<vmem>>, vector<4x72xbf16>
    %c0_75 = arith.constant 0 : index
    %c0_76 = arith.constant 0 : index
    %59 = vector.load %arg6[%c0_75, %c0_76] : memref<72x324xf32, #tpu.memory_space<vmem>>, vector<72x324xf32>
    %60 = arith.truncf %59 : vector<72x324xf32> to vector<72x324xbf16>
    %cst_77 = arith.constant dense<0.000000e+00> : vector<4x324xf32>
    %61 = tpu.matmul %58, %60, %cst_77 {dimension_numbers = #tpu.dot_dimension_numbers<[1], [0], [0], [1], [0, 0, 1, 1], [], []>} : vector<4x72xbf16>, vector<72x324xbf16>, vector<4x324xf32> -> vector<4x324xf32>
    %c0_78 = arith.constant 0 : index
    %c0_79 = arith.constant 0 : index
    %c128_80 = arith.constant 128 : index
    %62 = vector.load %arg1[%c0_78, %c0_79, %c128_80] : memref<1x4x580xf32, #tpu.memory_space<vmem>>, vector<1x4x324xf32>
    %63 = vector.shape_cast %62 : vector<1x4x324xf32> to vector<4x324xf32>
    %64 = arith.addf %61, %63 : vector<4x324xf32>
    %cst_81 = arith.constant 0.000000e+00 : f32
    %65 = vector.broadcast %cst_81 : f32 to vector<4x324xf32>
    %66 = arith.maximumf %64, %65 : vector<4x324xf32>
    %c0_82 = arith.constant 0 : index
    %c0_83 = arith.constant 0 : index
    %c0_84 = arith.constant 0 : index
    %67 = vector.load %arg5[%c0_82, %c0_83, %c0_84] : memref<1x4x324xf32, #tpu.memory_space<vmem>>, vector<1x4x324xf32>
    %68 = vector.shape_cast %67 : vector<1x4x324xf32> to vector<4x324xf32>
    %69 = vector.shape_cast %66 : vector<4x324xf32> to vector<1x4x324xf32>
    tpu.vector_store %arg5[%c0_82, %c0_83, %c0_84], %69 {strides = array<i32>} : memref<1x4x324xf32, #tpu.memory_space<vmem>>, vector<1x4x324xf32>,
    return
  }
  func.func @transform_0(%arg0: i32) -> (i32, i32, i32) {
    %c0_i32 = arith.constant 0 : i32
    %c0_i32_0 = arith.constant 0 : i32
    %c0_i32_1 = arith.constant 0 : i32
    return %arg0, %c0_i32, %c0_i32_0 : i32, i32, i32
  }
  func.func @transform_1(%arg0: i32) -> (i32, i32) {
    %c0_i32 = arith.constant 0 : i32
    %c0_i32_0 = arith.constant 0 : i32
    %c0_i32_1 = arith.constant 0 : i32
    return %c0_i32, %c0_i32_0 : i32, i32
  }
  func.func @transform_2(%arg0: i32) -> (i32, i32) {
    %c0_i32 = arith.constant 0 : i32
    %c0_i32_0 = arith.constant 0 : i32
    %c0_i32_1 = arith.constant 0 : i32
    return %c0_i32, %c0_i32_0 : i32, i32
  }
  func.func @transform_3(%arg0: i32) -> (i32, i32) {
    %c0_i32 = arith.constant 0 : i32
    %c0_i32_0 = arith.constant 0 : i32
    %c0_i32_1 = arith.constant 0 : i32
    return %c0_i32, %c0_i32_0 : i32, i32
  }
  func.func @transform_4(%arg0: i32) -> (i32, i32, i32) {
    %c0_i32 = arith.constant 0 : i32
    %c0_i32_0 = arith.constant 0 : i32
    %c0_i32_1 = arith.constant 0 : i32
    return %arg0, %c0_i32, %c0_i32_0 : i32, i32, i32
  }
}

</mosaic_0001>

<llo_original>
// kernel: residual_block_pallas.1
$region0: #{residual_block_pallas.1}
  #allocation0 [shape = 'u32[]', space=smem, size = 0x4, offset = 0x4, fixed_abs, tag = 'smem constant byte address 0x4 - core index']
  #allocation1 [shape = 'u32[144,128]{1,0:T(1,128)}', space=vmem, size = 0x12000, scoped, tag = 'internal scratch']
  #allocation2 [shape = 'f32[72,324]{1,0:T(8,128)}', space=vmem, size = 0x1b000, scoped, tag = 'scratch operand']
  #allocation3 [shape = 'f32[4,580]{1,0:T(4,128)}', space=vmem, size = 0x2800, scoped, tag = 'scratch operand']
  %s0 = inlined_call_operand.vmem [shape: f32[2,4,580], index: 0, kind: input, shape index: {}]
  %s1 = inlined_call_operand.vmem [shape: bf16[4,72], index: 1, kind: input, shape index: {}]
  %s2 = inlined_call_operand.vmem [shape: bf16[4,72], index: 2, kind: input, shape index: {}]
  %s3 = inlined_call_operand.vmem [shape: f32[1,324], index: 3, kind: input, shape index: {}]
  %s4 = inlined_call_operand.vmem [shape: f32[2,4,324], index: 4, kind: output, shape index: {}]
  %s5 = sld [smem:[#allocation0]]
  $region53: #{residual_block_pallas.1} parent=0
    _
  %s7 = ssub.s32 1, %s5
  %s8 = scalar_select 0, %s7, %s5
  loop: start=0, step=1, limit=4
  $region2: #{residual_block_pallas.1} parent=0 // loop_pre_header
    _
  $region3: #{residual_block_pallas.1} parent=0 // loop_header
    %s10 = sphi 0, %s14
    %p11 = scmp.ge.s32.totalorder %s10, 4
    %s20 = sphi 0, %s22
    %s23 = sphi 0, %s20
    %s24 = sphi 0, %s23
    %s40 = sphi 0, %s24
    %s44 = sphi 0, %s44
    %s46 = sphi 0, %s44
    %s47 = sphi 0, %s46
    %s61 = sphi 0, %s47
    %s65 = sphi 0, %s65
    %s67 = sphi 0, %s65
    %s68 = sphi 0, %s67
    %s82 = sphi 0, %s68
    %s86 = sphi 0, %s86
    %s88 = sphi 0, %s86
    %s89 = sphi 0, %s88
    %s103 = sphi 0, %s89
    %s109 = sphi 0, %s111
    %s112 = sphi 0, %s109
    %s113 = sphi 0, %s112
    %s129 = sphi 0, %s113
  $region4: #{residual_block_pallas.1} parent=0 // loop_header_branch
    %13 = sbr.rel (%p11) target = $region8
  $region5: #{residual_block_pallas.1} parent=0 // loop_body
    %s15 = ssub.s32 %s10, 1
    %s16 = ssub.s32 %s10, 2
    %s17 = sadd.s32 %s10, 1
    %s18 = ssub.s32 %s10, %s17
    %p19 = scmp.eq.s32.totalorder %s18, 0
    %s21 = sadd.s32 %s20, 1
    %s22 = scalar_select %p19, %s20, %s21
    %p25 = pneg %p19
    %p26 = scmp.eq.s32.totalorder %s10, 1
    %p27 = por %p25, %p26
    %p28 = scmp.ne.s32.totalorder %s20, %s23
    %p29 = scmp.eq.s32.totalorder %s10, 0
    %p30 = por %p28, %p29
    %p31 = scmp.ne.s32.totalorder %s20, %s23
    %p32 = scmp.eq.s32.totalorder %s15, 1
    %p33 = por %p31, %p32
    %p34 = scmp.ne.s32.totalorder %s23, %s24
    %p35 = scmp.eq.s32.totalorder %s15, 0
    %p36 = por %p34, %p35
    %p37 = scmp.ne.s32.totalorder %s23, %s24
    %p38 = scmp.eq.s32.totalorder %s16, 1
    %p39 = por %p37, %p38
    %p41 = scmp.ne.s32.totalorder %s24, %s40
    %p42 = scmp.eq.s32.totalorder %s16, 0
    %p43 = por %p41, %p42
    %s45 = sadd.s32 %s44, 1
    %p48 = scmp.eq.s32.totalorder %s10, 1
    %p49 = scmp.ne.s32.totalorder %s44, %s46
    %p50 = scmp.eq.s32.totalorder %s10, 0
    %p51 = por %p49, %p50
    %p52 = scmp.ne.s32.totalorder %s44, %s46
    %p53 = scmp.eq.s32.totalorder %s15, 1
    %p54 = por %p52, %p53
    %p55 = scmp.ne.s32.totalorder %s46, %s47
    %p56 = scmp.eq.s32.totalorder %s15, 0
    %p57 = por %p55, %p56
    %p58 = scmp.ne.s32.totalorder %s46, %s47
    %p59 = scmp.eq.s32.totalorder %s16, 1
    %p60 = por %p58, %p59
    %p62 = scmp.ne.s32.totalorder %s47, %s61
    %p63 = scmp.eq.s32.totalorder %s16, 0
    %p64 = por %p62, %p63
    %s66 = sadd.s32 %s65, 1
    %p69 = scmp.eq.s32.totalorder %s10, 1
    %p70 = scmp.ne.s32.totalorder %s65, %s67
    %p71 = scmp.eq.s32.totalorder %s10, 0
    %p72 = por %p70, %p71
    %p73 = scmp.ne.s32.totalorder %s65, %s67
    %p74 = scmp.eq.s32.totalorder %s15, 1
    %p75 = por %p73, %p74
    %p76 = scmp.ne.s32.totalorder %s67, %s68
    %p77 = scmp.eq.s32.totalorder %s15, 0
    %p78 = por %p76, %p77
    %p79 = scmp.ne.s32.totalorder %s67, %s68
    %p80 = scmp.eq.s32.totalorder %s16, 1
    %p81 = por %p79, %p80
    %p83 = scmp.ne.s32.totalorder %s68, %s82
    %p84 = scmp.eq.s32.totalorder %s16, 0
    %p85 = por %p83, %p84
    %s87 = sadd.s32 %s86, 1
    %p90 = scmp.eq.s32.totalorder %s10, 1
    %p91 = scmp.ne.s32.totalorder %s86, %s88
    %p92 = scmp.eq.s32.totalorder %s10, 0
    %p93 = por %p91, %p92
    %p94 = scmp.ne.s32.totalorder %s86, %s88
    %p95 = scmp.eq.s32.totalorder %s15, 1
    %p96 = por %p94, %p95
    %p97 = scmp.ne.s32.totalorder %s88, %s89
    %p98 = scmp.eq.s32.totalorder %s15, 0
    %p99 = por %p97, %p98
    %p100 = scmp.ne.s32.totalorder %s88, %s89
    %p101 = scmp.eq.s32.totalorder %s16, 1
    %p102 = por %p100, %p101
    %p104 = scmp.ne.s32.totalorder %s89, %s103
    %p105 = scmp.eq.s32.totalorder %s16, 0
    %p106 = por %p104, %p105
    %s107 = ssub.s32 %s10, %s17
    %p108 = scmp.eq.s32.totalorder %s107, 0
    %s110 = sadd.s32 %s109, 1
    %s111 = scalar_select %p108, %s109, %s110
    %p114 = pneg %p108
    %p115 = scmp.eq.s32.totalorder %s10, 1
    %p116 = por %p114, %p115
    %p117 = scmp.ne.s32.totalorder %s109, %s112
    %p118 = scmp.eq.s32.totalorder %s10, 0
    %p119 = por %p117, %p118
    %p120 = scmp.ne.s32.totalorder %s109, %s112
    %p121 = scmp.eq.s32.totalorder %s15, 1
    %p122 = por %p120, %p121
    %p123 = scmp.ne.s32.totalorder %s112, %s113
    %p124 = scmp.eq.s32.totalorder %s15, 0
    %p125 = por %p123, %p124
    %p126 = scmp.ne.s32.totalorder %s112, %s113
    %p127 = scmp.eq.s32.totalorder %s16, 1
    %p128 = por %p126, %p127
    %p130 = scmp.ne.s32.totalorder %s113, %s129
    %p131 = scmp.eq.s32.totalorder %s16, 0
    %p132 = por %p130, %p131
    %p133 = scmp.le.s32.totalorder 1, %s10
    %p134 = scmp.lt.s32.totalorder %s10, 3
    %p135 = pnand %p133, %p134
    %p136 = pneg %p135
    // Predicated region
    $region9: #{residual_block_pallas.1} parent=5 // pred_check
      _
    $region10: #{residual_block_pallas.1} parent=5 // pred_check_branch
      %138 = sbr.rel (%p135) target = $region12
    $region11: #{residual_block_pallas.1} parent=5 // pred_region
      %s139 = ssub.s32 %s10, 1
      // Predicated region
      $region13: #{residual_block_pallas.1} parent=11 // pred_check
        %p140 = pneg %p57
      $region14: #{residual_block_pallas.1} parent=11 // pred_check_branch
        %142 = sbr.rel (%p140) target = $region16
      $region15: #{residual_block_pallas.1} parent=11 // pred_region
        _
      $region16: #{residual_block_pallas.1} parent=11 // pred_fallthru
        _
      // Predicated region
      $region17: #{residual_block_pallas.1} parent=11 // pred_check
        %p143 = pneg %p78
      $region18: #{residual_block_pallas.1} parent=11 // pred_check_branch
        %145 = sbr.rel (%p143) target = $region20
      $region19: #{residual_block_pallas.1} parent=11 // pred_region
        _
      $region20: #{residual_block_pallas.1} parent=11 // pred_fallthru
        _
      // Predicated region
      $region21: #{residual_block_pallas.1} parent=11 // pred_check
        %p146 = pneg %p99
      $region22: #{residual_block_pallas.1} parent=11 // pred_check_branch
        %148 = sbr.rel (%p146) target = $region24
      $region23: #{residual_block_pallas.1} parent=11 // pred_region
        _
      $region24: #{residual_block_pallas.1} parent=11 // pred_fallthru
        _
    $region12: #{residual_block_pallas.1} parent=5 // pred_fallthru
      _
    %p149 = scmp.lt.s32.totalorder %s10, 2
    // Predicated region
    $region25: #{residual_block_pallas.1} parent=5 // pred_check
      %p150 = pneg %p149
    $region26: #{residual_block_pallas.1} parent=5 // pred_check_branch
      %152 = sbr.rel (%p150) target = $region28
    $region27: #{residual_block_pallas.1} parent=5 // pred_region
      // Predicated region
      $region29: #{residual_block_pallas.1} parent=27 // pred_check
        %p153 = pneg %p30
      $region30: #{residual_block_pallas.1} parent=27 // pred_check_branch
        %155 = sbr.rel (%p153) target = $region32
      $region31: #{residual_block_pallas.1} parent=27 // pred_region
        %p156 = scmp.lt.s32.totalorder %s10, 1
        %s157 = scalar_select %p156, %s10, 1
        %s158 = smul.addr %s157, 5
        %s159 = smul.addr %s158, 4
        %s160 = scalar_lea.vmem %s0, %s159
      $region32: #{residual_block_pallas.1} parent=27 // pred_fallthru
        _
    $region28: #{residual_block_pallas.1} parent=5 // pred_fallthru
      _
    %p161 = scmp.le.s32.totalorder 1, %s10
    %p162 = scmp.lt.s32.totalorder %s10, 3
    %p163 = pnand %p161, %p162
    %p164 = pneg %p163
    // Predicated region
    $region33: #{residual_block_pallas.1} parent=5 // pred_check
      _
    $region34: #{residual_block_pallas.1} parent=5 // pred_check_branch
      %166 = sbr.rel (%p163) target = $region36
    $region35: #{residual_block_pallas.1} parent=5 // pred_region
      %s167 = ssub.s32 %s10, 1
      %p168 = scmp.lt.s32.totalorder %s15, 1
      %s169 = scalar_select %p168, %s15, 1
      %s170 = smul.addr %s169, 5
      %s171 = smul.addr %s170, 4
      %s172 = scalar_lea.vmem %s0, %s171
      %p173 = pneg %p36
      %p174 = pneg %p33
      %p175 = pneg %p57
      %p176 = pneg %p54
      %p177 = pneg %p78
      %p178 = pneg %p75
      %p179 = pneg %p99
      %p180 = pneg %p96
      %p181 = pneg %p125
      %p182 = pneg %p122
      %p183 = scmp.lt.s32.totalorder %s15, 1
      %s184 = scalar_select %p183, %s15, 1
      %s185 = smul.addr %s184, 3
      %s186 = smul.addr %s185, 4
      %s187 = scalar_lea.vmem %s4, %s186
      %p188 = scmp.lt.s32.totalorder %s15, 1
      %s189 = scalar_select %p188, %s15, 1
      %s190 = smul.addr %s189, 5
      %s191 = smul.addr %s190, 4
      %s192 = scalar_lea.vmem %s0, %s191
      %p193 = scmp.lt.s32.totalorder %s15, 1
      %s194 = scalar_select %p193, %s15, 1
      %s195 = smul.addr %s194, 3
      %s196 = smul.addr %s195, 4
      %s197 = scalar_lea.vmem %s4, %s196
      %p199 = scmp.eq.s32.totalorder %s15, 0
      // Predicated region
      $region37: #{residual_block_pallas.1} parent=35 // pred_check
        %p200 = pneg %p199
      $region38: #{residual_block_pallas.1} parent=35 // pred_check_branch
        %202 = sbr.rel (%p200) target = $region40
      $region39: #{residual_block_pallas.1} parent=35 // pred_region
        %203 = vst [vmem:[#allocation2] sm:$0xff] 0.0
        %204 = vst [vmem:[#allocation2 + $0x8] sm:$0xff] 0.0
        %vm205 = vcmask 556032
        %206 = vst.msk [vmem:[#allocation2 + $0x10] sm:$0xff] %vm205, 0.0
        %207 = vst [vmem:[#allocation2 + $0x18] sm:$0xff] 0.0
        %208 = vst [vmem:[#allocation2 + $0x20] sm:$0xff] 0.0
        %209 = vst.msk [vmem:[#allocation2 + $0x28] sm:$0xff] %vm205, 0.0
        %210 = vst [vmem:[#allocation2 + $0x30] sm:$0xff] 0.0
        %211 = vst [vmem:[#allocation2 + $0x38] sm:$0xff] 0.0
        %212 = vst.msk [vmem:[#allocation2 + $0x40] sm:$0xff] %vm205, 0.0
        %213 = vst [vmem:[#allocation2 + $0x48] sm:$0xff] 0.0
        %214 = vst [vmem:[#allocation2 + $0x50] sm:$0xff] 0.0
        %215 = vst.msk [vmem:[#allocation2 + $0x58] sm:$0xff] %vm205, 0.0
        %216 = vst [vmem:[#allocation2 + $0x60] sm:$0xff] 0.0
        %217 = vst [vmem:[#allocation2 + $0x68] sm:$0xff] 0.0
        %218 = vst.msk [vmem:[#allocation2 + $0x70] sm:$0xff] %vm205, 0.0
        %219 = vst [vmem:[#allocation2 + $0x78] sm:$0xff] 0.0
        %220 = vst [vmem:[#allocation2 + $0x80] sm:$0xff] 0.0
        %221 = vst.msk [vmem:[#allocation2 + $0x88] sm:$0xff] %vm205, 0.0
        %222 = vst [vmem:[#allocation2 + $0x90] sm:$0xff] 0.0
        %223 = vst [vmem:[#allocation2 + $0x98] sm:$0xff] 0.0
        %224 = vst.msk [vmem:[#allocation2 + $0xa0] sm:$0xff] %vm205, 0.0
        %225 = vst [vmem:[#allocation2 + $0xa8] sm:$0xff] 0.0
        %226 = vst [vmem:[#allocation2 + $0xb0] sm:$0xff] 0.0
        %227 = vst.msk [vmem:[#allocation2 + $0xb8] sm:$0xff] %vm205, 0.0
        %228 = vst [vmem:[#allocation2 + $0xc0] sm:$0xff] 0.0
        %229 = vst [vmem:[#allocation2 + $0xc8] sm:$0xff] 0.0
        %230 = vst.msk [vmem:[#allocation2 + $0xd0] sm:$0xff] %vm205, 0.0
        %231 = vst [vmem:[#allocation3] sm:$0xff] 0.0
        %232 = vst [vmem:[#allocation3 + $0x8] sm:$0xff] 0.0
        %vm233 = vcmask 551936
        %234 = vst.msk [vmem:[#allocation3 + $0x10] sm:$0xf] %vm233, 0.0
      $region40: #{residual_block_pallas.1} parent=35 // pred_fallthru
        _
      %v235 = vld [vmem:[%s192] sm:$0xff]
      %v236 = vld [vmem:[%s192 + $0x8] sm:$0xff]
      %v239 = vcombine.high %v235, %v235
      %v240 = vcombine.high %v236, %v236
      %241 = vrot.lane.b32.xlu0 %v235, 19
      %v242 = vpop.permute.xlu0 %241
      %243 = vrot.lane.b32.xlu0 %v239, 19
      %v244 = vpop.permute.xlu0 %243
      %245 = vrot.lane.b32.xlu0 %v236, 19
      %v246 = vpop.permute.xlu0 %245
      %247 = vrot.lane.b32.xlu0 %v240, 19
      %v248 = vpop.permute.xlu0 %247
      %vm249 = vcmask 154624
      %v250 = vsel %vm249, %v242, %v244
      %v251 = vsel %vm249, %v244, %v246
      %v252 = vsel %vm249, %v246, %v248
      %256 = vst [vmem:[#allocation2] sm:$0xf] %v250
      %257 = vst [vmem:[#allocation2 + $0x8] sm:$0xf] %v251
      %vm258 = vcmask 551936
      %259 = vst.msk [vmem:[#allocation2 + $0x10] sm:$0xf] %vm258, %v252
      %v260 = vld [vmem:[%s192] sm:$0xff]
      %v261 = vld [vmem:[%s192 + $0x8] sm:$0xff]
      %v264 = vcombine.high %v260, %v260
      %v265 = vcombine.high %v261, %v261
      %266 = vrot.lane.b32.xlu0 %v260, 18
      %v267 = vpop.permute.xlu0 %266
      %268 = vrot.lane.b32.xlu0 %v264, 18
      %v269 = vpop.permute.xlu0 %268
      %270 = vrot.lane.b32.xlu0 %v261, 18
      %v271 = vpop.permute.xlu0 %270
      %272 = vrot.lane.b32.xlu0 %v265, 18
      %v273 = vpop.permute.xlu0 %272
      %vm274 = vcmask 146432
      %v275 = vsel %vm274, %v267, %v269
      %v276 = vsel %vm274, %v269, %v271
      %v277 = vsel %vm274, %v271, %v273
      %281 = vst [vmem:[#allocation2 + $0x18] sm:$0xf] %v275
      %282 = vst [vmem:[#allocation2 + $0x20] sm:$0xf] %v276
      %283 = vst.msk [vmem:[#allocation2 + $0x28] sm:$0xf] %vm258, %v277
      %v284 = vld [vmem:[%s192] sm:$0xff]
      %v285 = vld [vmem:[%s192 + $0x8] sm:$0xff]
      %v288 = vcombine.high %v284, %v284
      %v289 = vcombine.high %v285, %v285
      %290 = vrot.lane.b32.xlu0 %v284, 17
      %v291 = vpop.permute.xlu0 %290
      %292 = vrot.lane.b32.xlu0 %v288, 17
      %v293 = vpop.permute.xlu0 %292
      %294 = vrot.lane.b32.xlu0 %v285, 17
      %v295 = vpop.permute.xlu0 %294
      %296 = vrot.lane.b32.xlu0 %v289, 17
      %v297 = vpop.permute.xlu0 %296
      %vm298 = vcmask 138240
      %v299 = vsel %vm298, %v291, %v293
      %v300 = vsel %vm298, %v293, %v295
      %v301 = vsel %vm298, %v295, %v297
      %305 = vst [vmem:[#allocation2 + $0x30] sm:$0xf] %v299
      %306 = vst [vmem:[#allocation2 + $0x38] sm:$0xf] %v300
      %307 = vst.msk [vmem:[#allocation2 + $0x40] sm:$0xf] %vm258, %v301
      %v308 = vld [vmem:[%s192] sm:$0xff]
      %v309 = vld [vmem:[%s192 + $0x8] sm:$0xff]
      %v312 = vcombine.high %v308, %v308
      %v313 = vcombine.high %v309, %v309
      %314 = vrot.lane.b32.xlu0 %v308, 1
      %v315 = vpop.permute.xlu0 %314
      %316 = vrot.lane.b32.xlu0 %v312, 1
      %v317 = vpop.permute.xlu0 %316
      %318 = vrot.lane.b32.xlu0 %v309, 1
      %v319 = vpop.permute.xlu0 %318
      %320 = vrot.lane.b32.xlu0 %v313, 1
      %v321 = vpop.permute.xlu0 %320
      %vm322 = vcmask 7168
      %v323 = vsel %vm322, %v315, %v317
      %v324 = vsel %vm322, %v317, %v319
      %v325 = vsel %vm322, %v319, %v321
      %329 = vst [vmem:[#allocation2 + $0x48] sm:$0xf] %v323
      %330 = vst [vmem:[#allocation2 + $0x50] sm:$0xf] %v324
      %331 = vst.msk [vmem:[#allocation2 + $0x58] sm:$0xf] %vm258, %v325
      %v332 = vld [vmem:[%s192 + $0x4] sm:$0xff]
      %v333 = vld [vmem:[%s192 + $0xc] sm:$0xf]
      %v335 = vcombine.high %v332, %v332
      %337 = vst [vmem:[#allocation2 + $0x60] sm:$0xf] %v332
      %338 = vst [vmem:[#allocation2 + $0x68] sm:$0xf] %v335
      %339 = vst.msk [vmem:[#allocation2 + $0x70] sm:$0xf] %vm258, %v333
      %v340 = vld [vmem:[%s192 + $0x4] sm:$0xff]
      %v341 = vld [vmem:[%s192 + $0xc] sm:$0xf]
      %v344 = vcombine.high %v340, %v340
      %345 = vrot.lane.b32.xlu0 %v340, 127
      %v346 = vpop.permute.xlu0 %345
      %347 = vrot.lane.b32.xlu0 %v344, 127
      %v348 = vpop.permute.xlu0 %347
      %349 = vrot.lane.b32.xlu0 %v341, 127
      %v350 = vpop.permute.xlu0 %349
      %vm351 = vcmask 1039360
      %v352 = vsel %vm351, %v346, %v348
      %v353 = vsel %vm351, %v348, %v350
      %357 = vst [vmem:[#allocation2 + $0x78] sm:$0xf] %v352
      %358 = vst [vmem:[#allocation2 + $0x80] sm:$0xf] %v353
      %359 = vst.msk [vmem:[#allocation2 + $0x88] sm:$0xf] %vm258, %v350
      %v360 = vld [vmem:[%s192 + $0x4] sm:$0xff]
      %v361 = vld [vmem:[%s192 + $0xc] sm:$0xf]
      %v364 = vcombine.high %v360, %v360
      %365 = vrot.lane.b32.xlu0 %v360, 111
      %v366 = vpop.permute.xlu0 %365
      %367 = vrot.lane.b32.xlu0 %v364, 111
      %v368 = vpop.permute.xlu0 %367
      %369 = vrot.lane.b32.xlu0 %v361, 111
      %v370 = vpop.permute.xlu0 %369
      %vm371 = vcmask 908288
      %v372 = vsel %vm371, %v366, %v368
      %v373 = vsel %vm371, %v368, %v370
      %377 = vst [vmem:[#allocation2 + $0x90] sm:$0xf] %v372
      %378 = vst [vmem:[#allocation2 + $0x98] sm:$0xf] %v373
      %379 = vst.msk [vmem:[#allocation2 + $0xa0] sm:$0xf] %vm258, %v370
      %v380 = vld [vmem:[%s192 + $0x4] sm:$0xff]
      %v381 = vld [vmem:[%s192 + $0xc] sm:$0xf]
      %v384 = vcombine.high %v380, %v380
      %385 = vrot.lane.b32.xlu0 %v380, 110
      %v386 = vpop.permute.xlu0 %385
      %387 = vrot.lane.b32.xlu0 %v384, 110
      %v388 = vpop.permute.xlu0 %387
      %389 = vrot.lane.b32.xlu0 %v381, 110
      %v390 = vpop.permute.xlu0 %389
      %vm391 = vcmask 900096
      %v392 = vsel %vm391, %v386, %v388
      %v393 = vsel %vm391, %v388, %v390
      %397 = vst [vmem:[#allocation2 + $0xa8] sm:$0xf] %v392
      %398 = vst [vmem:[#allocation2 + $0xb0] sm:$0xf] %v393
      %399 = vst.msk [vmem:[#allocation2 + $0xb8] sm:$0xf] %vm258, %v390
      %v400 = vld [vmem:[%s192 + $0x4] sm:$0xff]
      %v401 = vld [vmem:[%s192 + $0xc] sm:$0xf]
      %v404 = vcombine.high %v400, %v400
      %405 = vrot.lane.b32.xlu0 %v400, 109
      %v406 = vpop.permute.xlu0 %405
      %407 = vrot.lane.b32.xlu0 %v404, 109
      %v408 = vpop.permute.xlu0 %407
      %409 = vrot.lane.b32.xlu0 %v401, 109
      %v410 = vpop.permute.xlu0 %409
      %vm411 = vcmask 891904
      %v412 = vsel %vm411, %v406, %v408
      %v413 = vsel %vm411, %v408, %v410
      %417 = vst [vmem:[#allocation2 + $0xc0] sm:$0xf] %v412
      %418 = vst [vmem:[#allocation2 + $0xc8] sm:$0xf] %v413
      %419 = vst.msk [vmem:[#allocation2 + $0xd0] sm:$0xf] %vm258, %v410
      %v420 = vld [vmem:[%s1] sm:$0x3]
      %v421 = vld [vmem:[#allocation2] sm:$0xff]
      %v422 = vld [vmem:[#allocation2 + $0x8] sm:$0xff]
      %v423 = vld [vmem:[#allocation2 + $0x10] sm:$0xff]
      %v424 = vld [vmem:[#allocation2 + $0x18] sm:$0xff]
      %v425 = vld [vmem:[#allocation2 + $0x20] sm:$0xff]
      %v426 = vld [vmem:[#allocation2 + $0x28] sm:$0xff]
      %v427 = vld [vmem:[#allocation2 + $0x30] sm:$0xff]
      %v428 = vld [vmem:[#allocation2 + $0x38] sm:$0xff]
      %v429 = vld [vmem:[#allocation2 + $0x40] sm:$0xff]
      %v430 = vld [vmem:[#allocation2 + $0x48] sm:$0xff]
      %v431 = vld [vmem:[#allocation2 + $0x50] sm:$0xff]
      %v432 = vld [vmem:[#allocation2 + $0x58] sm:$0xff]
      %v433 = vld [vmem:[#allocation2 + $0x60] sm:$0xff]
      %v434 = vld [vmem:[#allocation2 + $0x68] sm:$0xff]
      %v435 = vld [vmem:[#allocation2 + $0x70] sm:$0xff]
      %v436 = vld [vmem:[#allocation2 + $0x78] sm:$0xff]
      %v437 = vld [vmem:[#allocation2 + $0x80] sm:$0xff]
      %v438 = vld [vmem:[#allocation2 + $0x88] sm:$0xff]
      %v439 = vld [vmem:[#allocation2 + $0x90] sm:$0xff]
      %v440 = vld [vmem:[#allocation2 + $0x98] sm:$0xff]
      %v441 = vld [vmem:[#allocation2 + $0xa0] sm:$0xff]
      %v442 = vld [vmem:[#allocation2 + $0xa8] sm:$0xff]
      %v443 = vld [vmem:[#allocation2 + $0xb0] sm:$0xff]
      %v444 = vld [vmem:[#allocation2 + $0xb8] sm:$0xff]
      %v445 = vld [vmem:[#allocation2 + $0xc0] sm:$0xff]
      %v446 = vld [vmem:[#allocation2 + $0xc8] sm:$0xff]
      %v447 = vld [vmem:[#allocation2 + $0xd0] sm:$0xff]
      %v448 = vpack.c.bf16 %v424, %v421
      %v449 = vpack.c.bf16 %v425, %v422
      %v450 = vpack.c.bf16 %v426, %v423
      %v451 = vpack.c.bf16 %v430, %v427
      %v452 = vpack.c.bf16 %v431, %v428
      %v453 = vpack.c.bf16 %v432, %v429
      %v454 = vpack.c.bf16 %v436, %v433
      %v455 = vpack.c.bf16 %v437, %v434
      %v456 = vpack.c.bf16 %v438, %v435
      %v457 = vpack.c.bf16 %v442, %v439
      %v458 = vpack.c.bf16 %v443, %v440
      %v459 = vpack.c.bf16 %v444, %v441
      %v460 = vpack.c.bf16 %v445, %v445
      %v461 = vpack.c.bf16 %v446, %v446
      %v462 = vpack.c.bf16 %v447, %v447
      %vm463 = vcmask 588800
      %v465 = vsel %vm463, %v420, 0
      %vm467 = vcmask 1043456
      %v469 = vsel %vm467, %v460, 0
      %v472 = vsel %vm467, %v461, 0
      %v475 = vsel %vm467, %v462, 0
      %477 = vmatprep.subr.bf16.mxu0 0
      %478 = vmatpush1.bf16.msra.mxu0 0
      %479 = vmatprep.subr.bf16.mxu0 0
      %480 = vmatpush1.bf16.msra.mxu0 0
      %481 = vmatprep.subr.bf16.mxu0 0
      %482 = vmatpush1.bf16.msra.mxu0 0
      %483 = vmatprep.subr.bf16.mxu0 %v472
      %484 = vmatpush1.bf16.msra.mxu0 %v469
      %485 = vmatprep.subr.bf16.mxu0 %v458
      %486 = vmatpush1.bf16.msra.mxu0 %v457
      %487 = vmatprep.subr.bf16.mxu0 %v455
      %488 = vmatpush1.bf16.msra.mxu0 %v454
      %489 = vmatprep.subr.bf16.mxu0 %v452
      %490 = vmatpush1.bf16.msra.mxu0 %v451
      %491 = vmatprep.subr.bf16.mxu0 %v449
      %492 = vmatpush1.bf16.msra.mxu0 %v448
      %493 = vmatprep.subr.bf16.mxu0 0
      %494 = vmatpush2.bf16.msra.mxu0 0
      %495 = vmatprep.subr.bf16.mxu0 0
      %496 = vmatpush2.bf16.msra.mxu0 0
      %497 = vmatprep.subr.bf16.mxu0 0
      %498 = vmatpush2.bf16.msra.mxu0 0
      %499 = vmatprep.subr.bf16.mxu0 0
      %500 = vmatpush2.bf16.msra.mxu0 0
      %501 = vmatprep.subr.bf16.mxu0 0
      %502 = vmatpush2.bf16.msra.mxu0 0
      %503 = vmatprep.subr.bf16.mxu0 0
      %504 = vmatpush2.bf16.msra.mxu0 0
      %505 = vmatprep.subr.bf16.mxu0 0
      %506 = vmatpush2.bf16.msra.mxu0 0
      %507 = vmatprep.subr.bf16.mxu0 0
      %508 = vmatpush2.bf16.msra.mxu0 0
      %509 = vmatprep.mubr.bf16.mxu0 0
      %510 = vmatmul.mubr.bf16.gmra.mxu0 %v465
      %v511 = vpop.f32.mrf.mxu0
      %v512 = vadd.f32 0.0, %v511
      %v513 = vpop.f32.mrf.mxu0
      %v514 = vadd.f32 0.0, %v513
      %v515 = vpop.f32.mrf.mxu0
      %v516 = vpop.f32.mrf.mxu0
      %517 = vdwg.mxu0
      %518 = vmatprep.subr.bf16.mxu0 0
      %519 = vmatpush1.bf16.msra.mxu0 0
      %520 = vmatprep.subr.bf16.mxu0 0
      %521 = vmatpush1.bf16.msra.mxu0 0
      %522 = vmatprep.subr.bf16.mxu0 0
      %523 = vmatpush1.bf16.msra.mxu0 0
      %524 = vmatprep.subr.bf16.mxu0 0
      %525 = vmatpush1.bf16.msra.mxu0 %v475
      %526 = vmatprep.subr.bf16.mxu0 0
      %527 = vmatpush1.bf16.msra.mxu0 %v459
      %528 = vmatprep.subr.bf16.mxu0 0
      %529 = vmatpush1.bf16.msra.mxu0 %v456
      %530 = vmatprep.subr.bf16.mxu0 0
      %531 = vmatpush1.bf16.msra.mxu0 %v453
      %532 = vmatprep.subr.bf16.mxu0 0
      %533 = vmatpush1.bf16.msra.mxu0 %v450
      %534 = vmatprep.subr.bf16.mxu0 0
      %535 = vmatpush2.bf16.msra.mxu0 0
      %536 = vmatprep.subr.bf16.mxu0 0
      %537 = vmatpush2.bf16.msra.mxu0 0
      %538 = vmatprep.subr.bf16.mxu0 0
      %539 = vmatpush2.bf16.msra.mxu0 0
      %540 = vmatprep.subr.bf16.mxu0 0
      %541 = vmatpush2.bf16.msra.mxu0 0
      %542 = vmatprep.subr.bf16.mxu0 0
      %543 = vmatpush2.bf16.msra.mxu0 0
      %544 = vmatprep.subr.bf16.mxu0 0
      %545 = vmatpush2.bf16.msra.mxu0 0
      %546 = vmatprep.subr.bf16.mxu0 0
      %547 = vmatpush2.bf16.msra.mxu0 0
      %548 = vmatprep.subr.bf16.mxu0 0
      %549 = vmatpush2.bf16.msra.mxu0 0
      %550 = vmatprep.mubr.bf16.mxu0 0
      %551 = vmatmul.mubr.bf16.gmra.mxu0 %v465
      %v552 = vpop.f32.mrf.mxu0
      %v553 = vadd.f32 0.0, %v552
      %v554 = vpop.f32.mrf.mxu0
      %v555 = vpop.f32.mrf.mxu0
      %v556 = vpop.f32.mrf.mxu0
      %557 = vdwg.mxu0
      %v558 = vmax.f32 %v512, 0.0
      %v559 = vmax.f32 %v514, 0.0
      %v560 = vmax.f32 %v553, 0.0
      %v561 = vld [vmem:[%s3] sm:$0x7]
      %v563 = vlaneseq
      %v564 = vshrl.u32 %v563, 7
      %v565 = vsub.s32 0, %v564
      %v566 = vrot.slane %v561, %v565
      %v567 = vlaneseq
      %v568 = vshrl.u32 %v567, 7
      %v569 = vsub.s32 1, %v568
      %v570 = vrot.slane %v561, %v569
      %v571 = vlaneseq
      %v572 = vshrl.u32 %v571, 7
      %v573 = vsub.s32 2, %v572
      %v574 = vrot.slane %v561, %v573
      %v578 = vmul.f32 %v558, %v566
      %v579 = vmul.f32 %v559, %v570
      %v580 = vmul.f32 %v560, %v574
      %v583 = vcombine.low %v578, %v579
      %585 = vst [vmem:[#allocation3 + $0x4] sm:$0xff] %v583
      %586 = vst.msk [vmem:[#allocation3 + $0xc] sm:$0xf] %vm258, %v580
      %v587 = vld [vmem:[#allocation3] sm:$0xff]
      %v588 = vld [vmem:[#allocation3 + $0x8] sm:$0xff]
      %v591 = vcombine.high %v587, %v587
      %v592 = vcombine.high %v588, %v588
      %593 = vrot.lane.b32.xlu0 %v587, 19
      %v594 = vpop.permute.xlu0 %593
      %595 = vrot.lane.b32.xlu0 %v591, 19
      %v596 = vpop.permute.xlu0 %595
      %597 = vrot.lane.b32.xlu0 %v588, 19
      %v598 = vpop.permute.xlu0 %597
      %599 = vrot.lane.b32.xlu0 %v592, 19
      %v600 = vpop.permute.xlu0 %599
      %v601 = vsel %vm249, %v594, %v596
      %v602 = vsel %vm249, %v596, %v598
      %v603 = vsel %vm249, %v598, %v600
      %607 = vst [vmem:[#allocation2] sm:$0xf] %v601
      %608 = vst [vmem:[#allocation2 + $0x8] sm:$0xf] %v602
      %609 = vst.msk [vmem:[#allocation2 + $0x10] sm:$0xf] %vm258, %v603
      %v610 = vld [vmem:[#allocation3] sm:$0xff]
      %v611 = vld [vmem:[#allocation3 + $0x8] sm:$0xff]
      %v614 = vcombine.high %v610, %v610
      %v615 = vcombine.high %v611, %v611
      %616 = vrot.lane.b32.xlu0 %v610, 18
      %v617 = vpop.permute.xlu0 %616
      %618 = vrot.lane.b32.xlu0 %v614, 18
      %v619 = vpop.permute.xlu0 %618
      %620 = vrot.lane.b32.xlu0 %v611, 18
      %v621 = vpop.permute.xlu0 %620
      %622 = vrot.lane.b32.xlu0 %v615, 18
      %v623 = vpop.permute.xlu0 %622
      %v624 = vsel %vm274, %v617, %v619
      %v625 = vsel %vm274, %v619, %v621
      %v626 = vsel %vm274, %v621, %v623
      %630 = vst [vmem:[#allocation2 + $0x18] sm:$0xf] %v624
      %631 = vst [vmem:[#allocation2 + $0x20] sm:$0xf] %v625
      %632 = vst.msk [vmem:[#allocation2 + $0x28] sm:$0xf] %vm258, %v626
      %v633 = vld [vmem:[#allocation3] sm:$0xff]
      %v634 = vld [vmem:[#allocation3 + $0x8] sm:$0xff]
      %v637 = vcombine.high %v633, %v633
      %v638 = vcombine.high %v634, %v634
      %639 = vrot.lane.b32.xlu0 %v633, 17
      %v640 = vpop.permute.xlu0 %639
      %641 = vrot.lane.b32.xlu0 %v637, 17
      %v642 = vpop.permute.xlu0 %641
      %643 = vrot.lane.b32.xlu0 %v634, 17
      %v644 = vpop.permute.xlu0 %643
      %645 = vrot.lane.b32.xlu0 %v638, 17
      %v646 = vpop.permute.xlu0 %645
      %v647 = vsel %vm298, %v640, %v642
      %v648 = vsel %vm298, %v642, %v644
      %v649 = vsel %vm298, %v644, %v646
      %653 = vst [vmem:[#allocation2 + $0x30] sm:$0xf] %v647
      %654 = vst [vmem:[#allocation2 + $0x38] sm:$0xf] %v648
      %655 = vst.msk [vmem:[#allocation2 + $0x40] sm:$0xf] %vm258, %v649
      %v656 = vld [vmem:[#allocation3] sm:$0xff]
      %v657 = vld [vmem:[#allocation3 + $0x8] sm:$0xff]
      %v660 = vcombine.high %v656, %v656
      %v661 = vcombine.high %v657, %v657
      %662 = vrot.lane.b32.xlu0 %v656, 1
      %v663 = vpop.permute.xlu0 %662
      %664 = vrot.lane.b32.xlu0 %v660, 1
      %v665 = vpop.permute.xlu0 %664
      %666 = vrot.lane.b32.xlu0 %v657, 1
      %v667 = vpop.permute.xlu0 %666
      %668 = vrot.lane.b32.xlu0 %v661, 1
      %v669 = vpop.permute.xlu0 %668
      %v670 = vsel %vm322, %v663, %v665
      %v671 = vsel %vm322, %v665, %v667
      %v672 = vsel %vm322, %v667, %v669
      %676 = vst [vmem:[#allocation2 + $0x48] sm:$0xf] %v670
      %677 = vst [vmem:[#allocation2 + $0x50] sm:$0xf] %v671
      %678 = vst.msk [vmem:[#allocation2 + $0x58] sm:$0xf] %vm258, %v672
      %v679 = vld [vmem:[#allocation3 + $0x4] sm:$0xff]
      %v680 = vld [vmem:[#allocation3 + $0xc] sm:$0xf]
      %v682 = vcombine.high %v679, %v679
      %684 = vst [vmem:[#allocation2 + $0x60] sm:$0xf] %v679
      %685 = vst [vmem:[#allocation2 + $0x68] sm:$0xf] %v682
      %686 = vst.msk [vmem:[#allocation2 + $0x70] sm:$0xf] %vm258, %v680
      %v687 = vld [vmem:[#allocation3 + $0x4] sm:$0xff]
      %v688 = vld [vmem:[#allocation3 + $0xc] sm:$0xf]
      %v691 = vcombine.high %v687, %v687
      %692 = vrot.lane.b32.xlu0 %v687, 127
      %v693 = vpop.permute.xlu0 %692
      %694 = vrot.lane.b32.xlu0 %v691, 127
      %v695 = vpop.permute.xlu0 %694
      %696 = vrot.lane.b32.xlu0 %v688, 127
      %v697 = vpop.permute.xlu0 %696
      %v698 = vsel %vm351, %v693, %v695
      %v699 = vsel %vm351, %v695, %v697
      %703 = vst [vmem:[#allocation2 + $0x78] sm:$0xf] %v698
      %704 = vst [vmem:[#allocation2 + $0x80] sm:$0xf] %v699
      %705 = vst.msk [vmem:[#allocation2 + $0x88] sm:$0xf] %vm258, %v697
      %v706 = vld [vmem:[#allocation3 + $0x4] sm:$0xff]
      %v707 = vld [vmem:[#allocation3 + $0xc] sm:$0xf]
      %v710 = vcombine.high %v706, %v706
      %711 = vrot.lane.b32.xlu0 %v706, 111
      %v712 = vpop.permute.xlu0 %711
      %713 = vrot.lane.b32.xlu0 %v710, 111
      %v714 = vpop.permute.xlu0 %713
      %715 = vrot.lane.b32.xlu0 %v707, 111
      %v716 = vpop.permute.xlu0 %715
      %v717 = vsel %vm371, %v712, %v714
      %v718 = vsel %vm371, %v714, %v716
      %722 = vst [vmem:[#allocation2 + $0x90] sm:$0xf] %v717
      %723 = vst [vmem:[#allocation2 + $0x98] sm:$0xf] %v718
      %724 = vst.msk [vmem:[#allocation2 + $0xa0] sm:$0xf] %vm258, %v716
      %v725 = vld [vmem:[#allocation3 + $0x4] sm:$0xff]
      %v726 = vld [vmem:[#allocation3 + $0xc] sm:$0xf]
      %v729 = vcombine.high %v725, %v725
      %730 = vrot.lane.b32.xlu0 %v725, 110
      %v731 = vpop.permute.xlu0 %730
      %732 = vrot.lane.b32.xlu0 %v729, 110
      %v733 = vpop.permute.xlu0 %732
      %734 = vrot.lane.b32.xlu0 %v726, 110
      %v735 = vpop.permute.xlu0 %734
      %v736 = vsel %vm391, %v731, %v733
      %v737 = vsel %vm391, %v733, %v735
      %741 = vst [vmem:[#allocation2 + $0xa8] sm:$0xf] %v736
      %742 = vst [vmem:[#allocation2 + $0xb0] sm:$0xf] %v737
      %743 = vst.msk [vmem:[#allocation2 + $0xb8] sm:$0xf] %vm258, %v735
      %v744 = vld [vmem:[#allocation3 + $0x4] sm:$0xff]
      %v745 = vld [vmem:[#allocation3 + $0xc] sm:$0xf]
      %v748 = vcombine.high %v744, %v744
      %749 = vrot.lane.b32.xlu0 %v744, 109
      %v750 = vpop.permute.xlu0 %749
      %751 = vrot.lane.b32.xlu0 %v748, 109
      %v752 = vpop.permute.xlu0 %751
      %753 = vrot.lane.b32.xlu0 %v745, 109
      %v754 = vpop.permute.xlu0 %753
      %v755 = vsel %vm411, %v750, %v752
      %v756 = vsel %vm411, %v752, %v754
      %760 = vst [vmem:[#allocation2 + $0xc0] sm:$0xf] %v755
      %761 = vst [vmem:[#allocation2 + $0xc8] sm:$0xf] %v756
      %762 = vst.msk [vmem:[#allocation2 + $0xd0] sm:$0xf] %vm258, %v754
      %v763 = vld [vmem:[%s2] sm:$0x3]
      %v764 = vld [vmem:[#allocation2] sm:$0xff]
      %v765 = vld [vmem:[#allocation2 + $0x8] sm:$0xff]
      %v766 = vld [vmem:[#allocation2 + $0x10] sm:$0xff]
      %v767 = vld [vmem:[#allocation2 + $0x18] sm:$0xff]
      %v768 = vld [vmem:[#allocation2 + $0x20] sm:$0xff]
      %v769 = vld [vmem:[#allocation2 + $0x28] sm:$0xff]
      %v770 = vld [vmem:[#allocation2 + $0x30] sm:$0xff]
      %v771 = vld [vmem:[#allocation2 + $0x38] sm:$0xff]
      %v772 = vld [vmem:[#allocation2 + $0x40] sm:$0xff]
      %v773 = vld [vmem:[#allocation2 + $0x48] sm:$0xff]
      %v774 = vld [vmem:[#allocation2 + $0x50] sm:$0xff]
      %v775 = vld [vmem:[#allocation2 + $0x58] sm:$0xff]
      %v776 = vld [vmem:[#allocation2 + $0x60] sm:$0xff]
      %v777 = vld [vmem:[#allocation2 + $0x68] sm:$0xff]
      %v778 = vld [vmem:[#allocation2 + $0x70] sm:$0xff]
      %v779 = vld [vmem:[#allocation2 + $0x78] sm:$0xff]
      %v780 = vld [vmem:[#allocation2 + $0x80] sm:$0xff]
      %v781 = vld [vmem:[#allocation2 + $0x88] sm:$0xff]
      %v782 = vld [vmem:[#allocation2 + $0x90] sm:$0xff]
      %v783 = vld [vmem:[#allocation2 + $0x98] sm:$0xff]
      %v784 = vld [vmem:[#allocation2 + $0xa0] sm:$0xff]
      %v785 = vld [vmem:[#allocation2 + $0xa8] sm:$0xff]
      %v786 = vld [vmem:[#allocation2 + $0xb0] sm:$0xff]
      %v787 = vld [vmem:[#allocation2 + $0xb8] sm:$0xff]
      %v788 = vld [vmem:[#allocation2 + $0xc0] sm:$0xff]
      %v789 = vld [vmem:[#allocation2 + $0xc8] sm:$0xff]
      %v790 = vld [vmem:[#allocation2 + $0xd0] sm:$0xff]
      %v791 = vpack.c.bf16 %v767, %v764
      %v792 = vpack.c.bf16 %v768, %v765
      %v793 = vpack.c.bf16 %v769, %v766
      %v794 = vpack.c.bf16 %v773, %v770
      %v795 = vpack.c.bf16 %v774, %v771
      %v796 = vpack.c.bf16 %v775, %v772
      %v797 = vpack.c.bf16 %v779, %v776
      %v798 = vpack.c.bf16 %v780, %v777
      %v799 = vpack.c.bf16 %v781, %v778
      %v800 = vpack.c.bf16 %v785, %v782
      %v801 = vpack.c.bf16 %v786, %v783
      %v802 = vpack.c.bf16 %v787, %v784
      %v803 = vpack.c.bf16 %v788, %v788
      %v804 = vpack.c.bf16 %v789, %v789
      %v805 = vpack.c.bf16 %v790, %v790
      %v806 = vld [vmem:[%s192 + $0x4] sm:$0xff]
      %v807 = vld [vmem:[%s192 + $0xc] sm:$0xf]
      %v809 = vcombine.high %v806, %v806
      %v812 = vsel %vm463, %v763, 0
      %v815 = vsel %vm467, %v803, 0
      %v818 = vsel %vm467, %v804, 0
      %v821 = vsel %vm467, %v805, 0
      %823 = vmatprep.subr.bf16.mxu0 0
      %824 = vmatpush1.bf16.msra.mxu0 0
      %825 = vmatprep.subr.bf16.mxu0 0
      %826 = vmatpush1.bf16.msra.mxu0 0
      %827 = vmatprep.subr.bf16.mxu0 0
      %828 = vmatpush1.bf16.msra.mxu0 0
      %829 = vmatprep.subr.bf16.mxu0 %v818
      %830 = vmatpush1.bf16.msra.mxu0 %v815
      %831 = vmatprep.subr.bf16.mxu0 %v801
      %832 = vmatpush1.bf16.msra.mxu0 %v800
      %833 = vmatprep.subr.bf16.mxu0 %v798
      %834 = vmatpush1.bf16.msra.mxu0 %v797
      %835 = vmatprep.subr.bf16.mxu0 %v795
      %836 = vmatpush1.bf16.msra.mxu0 %v794
      %837 = vmatprep.subr.bf16.mxu0 %v792
      %838 = vmatpush1.bf16.msra.mxu0 %v791
      %839 = vmatprep.subr.bf16.mxu0 0
      %840 = vmatpush2.bf16.msra.mxu0 0
      %841 = vmatprep.subr.bf16.mxu0 0
      %842 = vmatpush2.bf16.msra.mxu0 0
      %843 = vmatprep.subr.bf16.mxu0 0
      %844 = vmatpush2.bf16.msra.mxu0 0
      %845 = vmatprep.subr.bf16.mxu0 0
      %846 = vmatpush2.bf16.msra.mxu0 0
      %847 = vmatprep.subr.bf16.mxu0 0
      %848 = vmatpush2.bf16.msra.mxu0 0
      %849 = vmatprep.subr.bf16.mxu0 0
      %850 = vmatpush2.bf16.msra.mxu0 0
      %851 = vmatprep.subr.bf16.mxu0 0
      %852 = vmatpush2.bf16.msra.mxu0 0
      %853 = vmatprep.subr.bf16.mxu0 0
      %854 = vmatpush2.bf16.msra.mxu0 0
      %855 = vmatprep.mubr.bf16.mxu0 0
      %856 = vmatmul.mubr.bf16.gmra.mxu0 %v812
      %v857 = vpop.f32.mrf.mxu0
      %v858 = vadd.f32 %v806, %v857
      %v859 = vpop.f32.mrf.mxu0
      %v860 = vadd.f32 %v809, %v859
      %v861 = vpop.f32.mrf.mxu0
      %v862 = vpop.f32.mrf.mxu0
      %863 = vdwg.mxu0
      %864 = vmatprep.subr.bf16.mxu0 0
      %865 = vmatpush1.bf16.msra.mxu0 0
      %866 = vmatprep.subr.bf16.mxu0 0
      %867 = vmatpush1.bf16.msra.mxu0 0
      %868 = vmatprep.subr.bf16.mxu0 0
      %869 = vmatpush1.bf16.msra.mxu0 0
      %870 = vmatprep.subr.bf16.mxu0 0
      %871 = vmatpush1.bf16.msra.mxu0 %v821
      %872 = vmatprep.subr.bf16.mxu0 0
      %873 = vmatpush1.bf16.msra.mxu0 %v802
      %874 = vmatprep.subr.bf16.mxu0 0
      %875 = vmatpush1.bf16.msra.mxu0 %v799
      %876 = vmatprep.subr.bf16.mxu0 0
      %877 = vmatpush1.bf16.msra.mxu0 %v796
      %878 = vmatprep.subr.bf16.mxu0 0
      %879 = vmatpush1.bf16.msra.mxu0 %v793
      %880 = vmatprep.subr.bf16.mxu0 0
      %881 = vmatpush2.bf16.msra.mxu0 0
      %882 = vmatprep.subr.bf16.mxu0 0
      %883 = vmatpush2.bf16.msra.mxu0 0
      %884 = vmatprep.subr.bf16.mxu0 0
      %885 = vmatpush2.bf16.msra.mxu0 0
      %886 = vmatprep.subr.bf16.mxu0 0
      %887 = vmatpush2.bf16.msra.mxu0 0
      %888 = vmatprep.subr.bf16.mxu0 0
      %889 = vmatpush2.bf16.msra.mxu0 0
      %890 = vmatprep.subr.bf16.mxu0 0
      %891 = vmatpush2.bf16.msra.mxu0 0
      %892 = vmatprep.subr.bf16.mxu0 0
      %893 = vmatpush2.bf16.msra.mxu0 0
      %894 = vmatprep.subr.bf16.mxu0 0
      %895 = vmatpush2.bf16.msra.mxu0 0
      %896 = vmatprep.mubr.bf16.mxu0 0
      %897 = vmatmul.mubr.bf16.gmra.mxu0 %v812
      %v898 = vpop.f32.mrf.mxu0
      %v899 = vadd.f32 %v807, %v898
      %v900 = vpop.f32.mrf.mxu0
      %v901 = vpop.f32.mrf.mxu0
      %v902 = vpop.f32.mrf.mxu0
      %903 = vdwg.mxu0
      %v904 = vmax.f32 %v858, 0.0
      %v905 = vmax.f32 %v860, 0.0
      %v906 = vmax.f32 %v899, 0.0
      %v909 = vcombine.low %v904, %v905
      %911 = vst [vmem:[%s197] sm:$0xff] %v909
      %912 = vst.msk [vmem:[%s197 + $0x8] sm:$0xf] %vm258, %v906
      %p913 = scmp.lt.s32.totalorder %s15, 1
      %s914 = scalar_select %p913, %s15, 1
      %s915 = smul.addr %s914, 3
      %s916 = smul.addr %s915, 4
      %s917 = scalar_lea.vmem %s4, %s916
      // Predicated region
      $region41: #{residual_block_pallas.1} parent=35 // pred_check
        %p918 = pneg %p122
      $region42: #{residual_block_pallas.1} parent=35 // pred_check_branch
        %920 = sbr.rel (%p918) target = $region44
      $region43: #{residual_block_pallas.1} parent=35 // pred_region
        _
      $region44: #{residual_block_pallas.1} parent=35 // pred_fallthru
        _
    $region36: #{residual_block_pallas.1} parent=5 // pred_fallthru
      _
    %p921 = scmp.le.s32.totalorder 2, %s10
    // Predicated region
    $region45: #{residual_block_pallas.1} parent=5 // pred_check
      %p922 = pneg %p921
    $region46: #{residual_block_pallas.1} parent=5 // pred_check_branch
      %924 = sbr.rel (%p922) target = $region48
    $region47: #{residual_block_pallas.1} parent=5 // pred_region
      %s925 = ssub.s32 %s10, 2
      // Predicated region
      $region49: #{residual_block_pallas.1} parent=47 // pred_check
        %p926 = pneg %p128
      $region50: #{residual_block_pallas.1} parent=47 // pred_check_branch
        %928 = sbr.rel (%p926) target = $region52
      $region51: #{residual_block_pallas.1} parent=47 // pred_region
        %p929 = scmp.lt.s32.totalorder %s16, 1
        %s930 = scalar_select %p929, %s16, 1
        %s931 = smul.addr %s930, 3
        %s932 = smul.addr %s931, 4
        %s933 = scalar_lea.vmem %s4, %s932
      $region52: #{residual_block_pallas.1} parent=47 // pred_fallthru
        _
    $region48: #{residual_block_pallas.1} parent=5 // pred_fallthru
      _
  $region6: #{residual_block_pallas.1} parent=0 // loop_footer
    %s14 = sadd.s32 1, %s10
  $region7: #{residual_block_pallas.1} parent=0 // loop_footer_branch
    %9 = sbr.rel target = $region3
  $region8: #{residual_block_pallas.1} parent=0 // loop_exit
    _

</llo_original>
